<compile_context>
chip_gen: v6e
topology: v6e:2x2x1
jax: 0.10.0
libtpu: 0.0.40
codegen_flags: <defaults>
</compile_context>

<pallas_src>
import functools

import jax
import jax.numpy as jnp
from jax import lax
from jax.experimental import pallas as pl
from jax.experimental.pallas import tpu as pltpu

LOG_STD_MAX = 2.0
LOG_STD_MIN = -20.0


def state_encoder_kernel(x_ref, eps_ref,
                         w_emb_ref, b_emb_ref,
                         w1_ref, b1_ref, w2_ref, b2_ref,
                         w3_ref, b3_ref, w4_ref, b4_ref,
                         w_head_ref, b_head_ref,
                         sample_ref, mu_ref, std_ref, *, latent_dim):
    """Whole StateEncoder forward, single grid point, everything in VMEM.

    Refs:
      x_ref     : (Bp, obs_dim + z_dim)        padded batch, obs||z concatenated
      eps_ref   : (Bp, latent_dim)             N(0,1) noise for rsample
      w_emb_ref : (obs_dim + z_dim, enc_size)  fused [W_obs^T ; W_z^T]
      b_emb_ref : (1, enc_size)                b_obs + b_z
      w{1..4}   : (.., hidden_dim)             layer weights (transposed)
      b{1..4}   : (1, hidden_dim)
      w_head_ref: (hidden_dim, 2*latent_dim)   fused [W_mu^T | W_logstd^T]
      b_head_ref: (1, 2*latent_dim)            [b_mu | b_logstd]
      outputs   : sample, mu, std              each (Bp, latent_dim)
    """
    f32 = jnp.float32
    x = x_ref[...]

    # Fused embedding:  e_obs + e_z  ==  x @ [[W_obs^T],[W_z^T]] + (b_obs + b_z)
    h = jnp.dot(x, w_emb_ref[...], preferred_element_type=f32) + b_emb_ref[...]

    # Four hidden layers with ReLU (straight-line MXU + VPU chain).
    h = jnp.maximum(
        jnp.dot(h, w1_ref[...], preferred_element_type=f32) + b1_ref[...], 0.0)
    h = jnp.maximum(
        jnp.dot(h, w2_ref[...], preferred_element_type=f32) + b2_ref[...], 0.0)
    h = jnp.maximum(
        jnp.dot(h, w3_ref[...], preferred_element_type=f32) + b3_ref[...], 0.0)
    h = jnp.maximum(
        jnp.dot(h, w4_ref[...], preferred_element_type=f32) + b4_ref[...], 0.0)

    # Fused heads: one matmul produces [mu | log_std].
    head = jnp.dot(h, w_head_ref[...], preferred_element_type=f32) + b_head_ref[...]
    mu = head[:, :latent_dim]
    log_std = head[:, latent_dim:2 * latent_dim]
    std = jnp.exp(jnp.clip(log_std, LOG_STD_MIN, LOG_STD_MAX))   # exp on EUP

    mu_ref[...] = mu
    std_ref[...] = std
    sample_ref[...] = mu + std * eps_ref[...]     # Normal(mu, std).rsample()


def state_encoder_forward(x, eps, fparams, *, obs_dim, z_dim, latent_dim):
    """Wrapper: slice the used input columns, pad batch to a sublane multiple,
    run the kernel, trim back to the original batch."""
    B = x.shape[0]
    feat = obs_dim + z_dim
    x = x[:, :feat]

    B_pad = max(8, ((B + 7) // 8) * 8)          # vreg sublane = 8
    pad = B_pad - B
    x_p = jnp.pad(x, ((0, pad), (0, 0)))
    eps_p = jnp.pad(eps, ((0, pad), (0, 0)))

    kernel = functools.partial(state_encoder_kernel, latent_dim=latent_dim)
    vmem = pl.BlockSpec(memory_space=pltpu.MemorySpace.VMEM)
    out_sd = jax.ShapeDtypeStruct((B_pad, latent_dim), jnp.float32)

    sample, mu, std = pl.pallas_call(
        kernel,
        out_shape=(out_sd, out_sd, out_sd),
        in_specs=[vmem] * 14,
        out_specs=(vmem, vmem, vmem),
    )(x_p, eps_p,
      fparams["w_emb"], fparams["b_emb"],
      fparams["w1"], fparams["b1"], fparams["w2"], fparams["b2"],
      fparams["w3"], fparams["b3"], fparams["w4"], fparams["b4"],
      fparams["w_head"], fparams["b_head"])

    return sample[:B], mu[:B], std[:B]


def init_params(key, *, obs_dim, z_dim, enc_size, hidden_dim, latent_dim):
    """PyTorch-style uniform init; weights stored pre-transposed as [in, out]."""
    def uniform(k, shape, fan_in):
        bound = 1.0 / jnp.sqrt(jnp.float32(fan_in))
        return jax.random.uniform(k, shape, jnp.float32, -bound, bound)

    ks = jax.random.split(key, 16)
    return {
        "w_obs": uniform(ks[0], (obs_dim, enc_size), obs_dim),
        "b_obs": uniform(ks[1], (1, enc_size), obs_dim),
        "w_z":   uniform(ks[2], (z_dim, enc_size), z_dim),
        "b_z":   uniform(ks[3], (1, enc_size), z_dim),
        "w1":    uniform(ks[4], (enc_size, hidden_dim), enc_size),
        "b1":    uniform(ks[5], (1, hidden_dim), enc_size),
        "w2":    uniform(ks[6], (hidden_dim, hidden_dim), hidden_dim),
        "b2":    uniform(ks[7], (1, hidden_dim), hidden_dim),
        "w3":    uniform(ks[8], (hidden_dim, hidden_dim), hidden_dim),
        "b3":    uniform(ks[9], (1, hidden_dim), hidden_dim),
        "w4":    uniform(ks[10], (hidden_dim, hidden_dim), hidden_dim),
        "b4":    uniform(ks[11], (1, hidden_dim), hidden_dim),
        "w_mu":  uniform(ks[12], (hidden_dim, latent_dim), hidden_dim),
        "b_mu":  uniform(ks[13], (1, latent_dim), hidden_dim),
        "w_ls":  uniform(ks[14], (hidden_dim, latent_dim), hidden_dim),
        "b_ls":  uniform(ks[15], (1, latent_dim), hidden_dim),
    }


def fold_params(p):
    """One-time wrapper-side folds (amortized across kernel calls):
       - embed_obs & embed_act -> single [obs_dim+z_dim, enc_size] matmul
       - fc_mu & log_std       -> single [hidden_dim, 2*latent_dim] matmul
    """
    folded = {
        "w_emb":  jnp.concatenate([p["w_obs"], p["w_z"]], axis=0),
        "b_emb":  p["b_obs"] + p["b_z"],
        "w_head": jnp.concatenate([p["w_mu"], p["w_ls"]], axis=1),
        "b_head": jnp.concatenate([p["b_mu"], p["b_ls"]], axis=1),
    }
    for k in ("w1", "b1", "w2", "b2", "w3", "b3", "w4", "b4"):
        folded[k] = p[k]
    return folded


def state_encoder_reference(x, eps, p, *, obs_dim, z_dim):
    """Pure-JAX reference mirroring the PyTorch forward."""
    hp = lax.Precision.HIGHEST
    e_obs = jnp.dot(x[:, :obs_dim], p["w_obs"], precision=hp) + p["b_obs"]
    e_z = jnp.dot(x[:, obs_dim:obs_dim + z_dim], p["w_z"], precision=hp) + p["b_z"]
    h = e_obs + e_z
    for i in (1, 2, 3, 4):
        h = jnp.maximum(jnp.dot(h, p[f"w{i}"], precision=hp) + p[f"b{i}"], 0.0)
    mu = jnp.dot(h, p["w_mu"], precision=hp) + p["b_mu"]
    log_std = jnp.dot(h, p["w_ls"], precision=hp) + p["b_ls"]
    std = jnp.exp(jnp.clip(log_std, LOG_STD_MIN, LOG_STD_MAX))
    sample = mu + std * eps
    return sample, mu, std


if __name__ == "__main__":
    # Small shapes consistent with StateEncoder(latent_dim, obs_dim, z_dim, enc_size, hidden_dim)
    B = 2
    obs_dim, z_dim = 12, 4
    enc_size, hidden_dim, latent_dim = 32, 64, 8

    key = jax.random.PRNGKey(0)
    k_x, k_eps, k_p = jax.random.split(key, 3)
    x = jax.random.normal(k_x, (B, obs_dim + z_dim), jnp.float32)
    eps = jax.random.normal(k_eps, (B, latent_dim), jnp.float32)

    params = init_params(k_p, obs_dim=obs_dim, z_dim=z_dim, enc_size=enc_size,
                         hidden_dim=hidden_dim, latent_dim=latent_dim)
    fparams = fold_params(params)

    sample, mu, std = state_encoder_forward(
        x, eps, fparams, obs_dim=obs_dim, z_dim=z_dim, latent_dim=latent_dim)
    sample, mu, std = jax.block_until_ready((sample, mu, std))
    assert sample.shape == (B, latent_dim)
    assert mu.shape == (B, latent_dim)
    assert std.shape == (B, latent_dim)

    ref_sample, ref_mu, ref_std = jax.block_until_ready(
        state_encoder_reference(x, eps, params, obs_dim=obs_dim, z_dim=z_dim))

    for got, want, name in ((sample, ref_sample, "sample"),
                            (mu, ref_mu, "mu"),
                            (std, ref_std, "std")):
        assert jnp.allclose(got, want, rtol=1e-3, atol=1e-3), (
            f"{name}: max abs err {jnp.max(jnp.abs(got - want))}")

    print("KERNEL_OK")
</pallas_src>

<mosaic_0001>
module attributes {stable_mosaic.version = 11 : i64} {
  func.func @state_encoder_kernel(%arg0: memref<8x16xf32, #tpu.memory_space<vmem>>, %arg1: memref<8x8xf32, #tpu.memory_space<vmem>>, %arg2: memref<16x32xf32, #tpu.memory_space<vmem>>, %arg3: memref<1x32xf32, #tpu.memory_space<vmem>>, %arg4: memref<32x64xf32, #tpu.memory_space<vmem>>, %arg5: memref<1x64xf32, #tpu.memory_space<vmem>>, %arg6: memref<64x64xf32, #tpu.memory_space<vmem>>, %arg7: memref<1x64xf32, #tpu.memory_space<vmem>>, %arg8: memref<64x64xf32, #tpu.memory_space<vmem>>, %arg9: memref<1x64xf32, #tpu.memory_space<vmem>>, %arg10: memref<64x64xf32, #tpu.memory_space<vmem>>, %arg11: memref<1x64xf32, #tpu.memory_space<vmem>>, %arg12: memref<64x16xf32, #tpu.memory_space<vmem>>, %arg13: memref<1x16xf32, #tpu.memory_space<vmem>>, %arg14: memref<8x8xf32, #tpu.memory_space<vmem>>, %arg15: memref<8x8xf32, #tpu.memory_space<vmem>>, %arg16: memref<8x8xf32, #tpu.memory_space<vmem>>) attributes {dimension_semantics = [], scalar_prefetch = 0 : i64, scratch_operands = 0 : i64, tpu.core_type = #tpu.core_type<tc>} {
    %c0 = arith.constant 0 : index
    %c0_0 = arith.constant 0 : index
    %0 = vector.load %arg0[%c0, %c0_0] : memref<8x16xf32, #tpu.memory_space<vmem>>, vector<8x16xf32>
    %c0_1 = arith.constant 0 : index
    %c0_2 = arith.constant 0 : index
    %1 = vector.load %arg2[%c0_1, %c0_2] : memref<16x32xf32, #tpu.memory_space<vmem>>, vector<16x32xf32>
    %cst = arith.constant dense<0.000000e+00> : vector<8x32xf32>
    %2 = tpu.matmul %0, %1, %cst {dimension_numbers = #tpu.dot_dimension_numbers<[1], [0], [0], [1], [0, 0, 1, 1], [], []>} : vector<8x16xf32>, vector<16x32xf32>, vector<8x32xf32> -> vector<8x32xf32>
    %c0_3 = arith.constant 0 : index
    %c0_4 = arith.constant 0 : index
    %3 = vector.load %arg3[%c0_3, %c0_4] : memref<1x32xf32, #tpu.memory_space<vmem>>, vector<1x32xf32>
    %4 = vector.broadcast %3 : vector<1x32xf32> to vector<8x32xf32>
    %5 = arith.addf %2, %4 : vector<8x32xf32>
    %c0_5 = arith.constant 0 : index
    %c0_6 = arith.constant 0 : index
    %6 = vector.load %arg4[%c0_5, %c0_6] : memref<32x64xf32, #tpu.memory_space<vmem>>, vector<32x64xf32>
    %cst_7 = arith.constant dense<0.000000e+00> : vector<8x64xf32>
    %7 = tpu.matmul %5, %6, %cst_7 {dimension_numbers = #tpu.dot_dimension_numbers<[1], [0], [0], [1], [0, 0, 1, 1], [], []>} : vector<8x32xf32>, vector<32x64xf32>, vector<8x64xf32> -> vector<8x64xf32>
    %c0_8 = arith.constant 0 : index
    %c0_9 = arith.constant 0 : index
    %8 = vector.load %arg5[%c0_8, %c0_9] : memref<1x64xf32, #tpu.memory_space<vmem>>, vector<1x64xf32>
    %9 = vector.broadcast %8 : vector<1x64xf32> to vector<8x64xf32>
    %10 = arith.addf %7, %9 : vector<8x64xf32>
    %cst_10 = arith.constant 0.000000e+00 : f32
    %11 = vector.broadcast %cst_10 : f32 to vector<8x64xf32>
    %12 = arith.maximumf %10, %11 : vector<8x64xf32>
    %c0_11 = arith.constant 0 : index
    %c0_12 = arith.constant 0 : index
    %13 = vector.load %arg6[%c0_11, %c0_12] : memref<64x64xf32, #tpu.memory_space<vmem>>, vector<64x64xf32>
    %cst_13 = arith.constant dense<0.000000e+00> : vector<8x64xf32>
    %14 = tpu.matmul %12, %13, %cst_13 {dimension_numbers = #tpu.dot_dimension_numbers<[1], [0], [0], [1], [0, 0, 1, 1], [], []>} : vector<8x64xf32>, vector<64x64xf32>, vector<8x64xf32> -> vector<8x64xf32>
    %c0_14 = arith.constant 0 : index
    %c0_15 = arith.constant 0 : index
    %15 = vector.load %arg7[%c0_14, %c0_15] : memref<1x64xf32, #tpu.memory_space<vmem>>, vector<1x64xf32>
    %16 = vector.broadcast %15 : vector<1x64xf32> to vector<8x64xf32>
    %17 = arith.addf %14, %16 : vector<8x64xf32>
    %cst_16 = arith.constant 0.000000e+00 : f32
    %18 = vector.broadcast %cst_16 : f32 to vector<8x64xf32>
    %19 = arith.maximumf %17, %18 : vector<8x64xf32>
    %c0_17 = arith.constant 0 : index
    %c0_18 = arith.constant 0 : index
    %20 = vector.load %arg8[%c0_17, %c0_18] : memref<64x64xf32, #tpu.memory_space<vmem>>, vector<64x64xf32>
    %cst_19 = arith.constant dense<0.000000e+00> : vector<8x64xf32>
    %21 = tpu.matmul %19, %20, %cst_19 {dimension_numbers = #tpu.dot_dimension_numbers<[1], [0], [0], [1], [0, 0, 1, 1], [], []>} : vector<8x64xf32>, vector<64x64xf32>, vector<8x64xf32> -> vector<8x64xf32>
    %c0_20 = arith.constant 0 : index
    %c0_21 = arith.constant 0 : index
    %22 = vector.load %arg9[%c0_20, %c0_21] : memref<1x64xf32, #tpu.memory_space<vmem>>, vector<1x64xf32>
    %23 = vector.broadcast %22 : vector<1x64xf32> to vector<8x64xf32>
    %24 = arith.addf %21, %23 : vector<8x64xf32>
    %cst_22 = arith.constant 0.000000e+00 : f32
    %25 = vector.broadcast %cst_22 : f32 to vector<8x64xf32>
    %26 = arith.maximumf %24, %25 : vector<8x64xf32>
    %c0_23 = arith.constant 0 : index
    %c0_24 = arith.constant 0 : index
    %27 = vector.load %arg10[%c0_23, %c0_24] : memref<64x64xf32, #tpu.memory_space<vmem>>, vector<64x64xf32>
    %cst_25 = arith.constant dense<0.000000e+00> : vector<8x64xf32>
    %28 = tpu.matmul %26, %27, %cst_25 {dimension_numbers = #tpu.dot_dimension_numbers<[1], [0], [0], [1], [0, 0, 1, 1], [], []>} : vector<8x64xf32>, vector<64x64xf32>, vector<8x64xf32> -> vector<8x64xf32>
    %c0_26 = arith.constant 0 : index
    %c0_27 = arith.constant 0 : index
    %29 = vector.load %arg11[%c0_26, %c0_27] : memref<1x64xf32, #tpu.memory_space<vmem>>, vector<1x64xf32>
    %30 = vector.broadcast %29 : vector<1x64xf32> to vector<8x64xf32>
    %31 = arith.addf %28, %30 : vector<8x64xf32>
    %cst_28 = arith.constant 0.000000e+00 : f32
    %32 = vector.broadcast %cst_28 : f32 to vector<8x64xf32>
    %33 = arith.maximumf %31, %32 : vector<8x64xf32>
    %c0_29 = arith.constant 0 : index
    %c0_30 = arith.constant 0 : index
    %34 = vector.load %arg12[%c0_29, %c0_30] : memref<64x16xf32, #tpu.memory_space<vmem>>, vector<64x16xf32>
    %cst_31 = arith.constant dense<0.000000e+00> : vector<8x16xf32>
    %35 = tpu.matmul %33, %34, %cst_31 {dimension_numbers = #tpu.dot_dimension_numbers<[1], [0], [0], [1], [0, 0, 1, 1], [], []>} : vector<8x64xf32>, vector<64x16xf32>, vector<8x16xf32> -> vector<8x16xf32>
    %c0_32 = arith.constant 0 : index
    %c0_33 = arith.constant 0 : index
    %36 = vector.load %arg13[%c0_32, %c0_33] : memref<1x16xf32, #tpu.memory_space<vmem>>, vector<1x16xf32>
    %37 = vector.broadcast %36 : vector<1x16xf32> to vector<8x16xf32>
    %38 = arith.addf %35, %37 : vector<8x16xf32>
    %39 = vector.extract_strided_slice %38 {offsets = [0, 0], sizes = [8, 8], strides = [1, 1]} : vector<8x16xf32> to vector<8x8xf32>
    %40 = vector.extract_strided_slice %38 {offsets = [0, 8], sizes = [8, 8], strides = [1, 1]} : vector<8x16xf32> to vector<8x8xf32>
    %cst_34 = arith.constant -2.000000e+01 : f32
    %cst_35 = arith.constant 2.000000e+00 : f32
    %41 = vector.broadcast %cst_34 : f32 to vector<8x8xf32>
    %42 = arith.maximumf %41, %40 : vector<8x8xf32>
    %43 = vector.broadcast %cst_35 : f32 to vector<8x8xf32>
    %44 = arith.minimumf %43, %42 : vector<8x8xf32>
    %45 = math.exp %44 : vector<8x8xf32>
    %c0_36 = arith.constant 0 : index
    %c0_37 = arith.constant 0 : index
    %46 = vector.load %arg15[%c0_36, %c0_37] : memref<8x8xf32, #tpu.memory_space<vmem>>, vector<8x8xf32>
    tpu.vector_store %arg15[%c0_36, %c0_37], %39 {strides = array<i32>} : memref<8x8xf32, #tpu.memory_space<vmem>>, vector<8x8xf32>,
    %c0_38 = arith.constant 0 : index
    %c0_39 = arith.constant 0 : index
    %47 = vector.load %arg16[%c0_38, %c0_39] : memref<8x8xf32, #tpu.memory_space<vmem>>, vector<8x8xf32>
    tpu.vector_store %arg16[%c0_38, %c0_39], %45 {strides = array<i32>} : memref<8x8xf32, #tpu.memory_space<vmem>>, vector<8x8xf32>,
    %c0_40 = arith.constant 0 : index
    %c0_41 = arith.constant 0 : index
    %48 = vector.load %arg1[%c0_40, %c0_41] : memref<8x8xf32, #tpu.memory_space<vmem>>, vector<8x8xf32>
    %49 = arith.mulf %45, %48 : vector<8x8xf32>
    %50 = arith.addf %39, %49 : vector<8x8xf32>
    %c0_42 = arith.constant 0 : index
    %c0_43 = arith.constant 0 : index
    %51 = vector.load %arg14[%c0_42, %c0_43] : memref<8x8xf32, #tpu.memory_space<vmem>>, vector<8x8xf32>
    tpu.vector_store %arg14[%c0_42, %c0_43], %50 {strides = array<i32>} : memref<8x8xf32, #tpu.memory_space<vmem>>, vector<8x8xf32>,
    return
  }
}

</mosaic_0001>

<llo_original>
// kernel: tpu_custom_call.1
$region0: #{tpu_custom_call.1}
  #allocation0 [shape = 'u32[]', space=smem, size = 0x4, offset = 0x4, fixed_abs, tag = 'smem constant byte address 0x4 - core index']
  #allocation1 [shape = 'u32[144,128]{1,0:T(1,128)}', space=vmem, size = 0x12000, scoped, tag = 'internal scratch']
  %s0 = inlined_call_operand.hbm [shape: f32[8,16], index: 0, kind: input, shape index: {}]
  %s1 = inlined_call_operand.hbm [shape: f32[8,8], index: 1, kind: input, shape index: {}]
  %s2 = inlined_call_operand.vmem [shape: f32[16,32], index: 2, kind: input, shape index: {}]
  %s3 = inlined_call_operand.vmem [shape: f32[1,32], index: 3, kind: input, shape index: {}]
  %s4 = inlined_call_operand.hbm [shape: f32[32,64], index: 4, kind: input, shape index: {}]
  %s5 = inlined_call_operand.vmem [shape: f32[1,64], index: 5, kind: input, shape index: {}]
  %s6 = inlined_call_operand.vmem [shape: f32[64,64], index: 6, kind: input, shape index: {}]
  %s7 = inlined_call_operand.vmem [shape: f32[1,64], index: 7, kind: input, shape index: {}]
  %s8 = inlined_call_operand.hbm [shape: f32[64,64], index: 8, kind: input, shape index: {}]
  %s9 = inlined_call_operand.vmem [shape: f32[1,64], index: 9, kind: input, shape index: {}]
  %s10 = inlined_call_operand.hbm [shape: f32[64,64], index: 10, kind: input, shape index: {}]
  %s11 = inlined_call_operand.vmem [shape: f32[1,64], index: 11, kind: input, shape index: {}]
  %s12 = inlined_call_operand.vmem [shape: f32[64,16], index: 12, kind: input, shape index: {}]
  %s13 = inlined_call_operand.vmem [shape: f32[1,16], index: 13, kind: input, shape index: {}]
  %s14 = inlined_call_operand.hbm [shape: f32[8,8], index: 14, kind: output, shape index: {0}]
  %s15 = inlined_call_operand.hbm [shape: f32[8,8], index: 15, kind: output, shape index: {1}]
  %s16 = inlined_call_operand.hbm [shape: f32[8,8], index: 16, kind: output, shape index: {2}]
  %17 = xla_tuple %s14, %s15, %s16
  %s18 = sld [smem:[#allocation0]]
  $region102: #{tpu_custom_call.1} parent=0
    _
  %s20 = ssub.s32 1, %s18
  %s21 = scalar_select 0, %s20, %s18
  $region1: #{tpu_custom_call.1} parent=0
    #allocation2 [shape = 'u8[4096]{0}', space=vmem, size = 0x1000, scoped, tag = 'input window, operand 0, single buffered']
    #allocation3 [shape = 's32[1]{0}', space=sflag, size = 0x4, scoped, tag = 'scoped memory for tpu_custom_call.1']
    #allocation4 [shape = 's32[1]{0}', space=sflag, size = 0x4, scoped, tag = 'scoped memory for tpu_custom_call.1']
    #allocation5 [shape = 'u8[4096]{0}', space=vmem, size = 0x1000, scoped, tag = 'input window, operand 1, single buffered']
    #allocation6 [shape = 's32[1]{0}', space=sflag, size = 0x4, scoped, tag = 'scoped memory for tpu_custom_call.1']
    #allocation7 [shape = 'u8[16384]{0}', space=vmem, size = 0x4000, scoped, tag = 'input window, operand 4, single buffered']
    #allocation8 [shape = 'u8[32768]{0}', space=vmem, size = 0x8000, scoped, tag = 'input window, operand 8, single buffered']
    #allocation9 [shape = 's32[1]{0}', space=sflag, size = 0x4, scoped, tag = 'scoped memory for tpu_custom_call.1']
    #allocation10 [shape = 'u8[32768]{0}', space=vmem, size = 0x8000, scoped, tag = 'input window, operand 10, single buffered']
    #allocation11 [shape = 'u8[4096]{0}', space=vmem, size = 0x1000, scoped, tag = 'output window, operand 0, single buffered']
    #allocation12 [shape = 'u8[4096]{0}', space=vmem, size = 0x1000, scoped, tag = 'output window, operand 1, single buffered']
    #allocation13 [shape = 's32[1]{0}', space=sflag, size = 0x4, scoped, tag = 'scoped memory for tpu_custom_call.1']
    #allocation14 [shape = 'u8[4096]{0}', space=vmem, size = 0x1000, scoped, tag = 'output window, operand 2, single buffered']
    %22 = vsyncpa [#allocation3], 0
    %23 = vsyncpa [#allocation6], 0
    %24 = vsyncpa [#allocation9], 0
    %25 = vsyncpa [#allocation4], 0
    %26 = vsyncpa [#allocation13], 0
    // Predicated region
    $region2: #{tpu_custom_call.1} parent=1 // pred_check
      _
    $region3: #{tpu_custom_call.1} parent=1 // pred_check_branch
      %28 = sbr.rel (0) target = $region5
    $region4: #{tpu_custom_call.1} parent=1 // pred_region
      %s30 = ssub.s32 128, 128
      %31 = vsyncadd [#allocation3], %s30
      %s33 = sshll.u32 [#allocation2], 4
      %s34 = int_to_ptr.vmem [resolvable:$true] %s33
      %36 = dma.hbm_to_vmem [thread:$0]  %s0, 128, %s34, [#allocation3]
    $region5: #{tpu_custom_call.1} parent=1 // pred_fallthru
      _
    // Predicated region
    $region6: #{tpu_custom_call.1} parent=1 // pred_check
      _
    $region7: #{tpu_custom_call.1} parent=1 // pred_check_branch
      %38 = sbr.rel (0) target = $region9
    $region8: #{tpu_custom_call.1} parent=1 // pred_region
      %s40 = ssub.s32 128, 128
      %41 = vsyncadd [#allocation6], %s40
      %s43 = sshll.u32 [#allocation5], 4
      %s44 = int_to_ptr.vmem [resolvable:$true] %s43
      %46 = dma.hbm_to_vmem [thread:$0]  %s1, 128, %s44, [#allocation6]
    $region9: #{tpu_custom_call.1} parent=1 // pred_fallthru
      _
    // Predicated region
    $region10: #{tpu_custom_call.1} parent=1 // pred_check
      _
    $region11: #{tpu_custom_call.1} parent=1 // pred_check_branch
      %48 = sbr.rel (0) target = $region13
    $region12: #{tpu_custom_call.1} parent=1 // pred_region
      _
    $region13: #{tpu_custom_call.1} parent=1 // pred_fallthru
      _
    // Predicated region
    $region14: #{tpu_custom_call.1} parent=1 // pred_check
      _
    $region15: #{tpu_custom_call.1} parent=1 // pred_check_branch
      %50 = sbr.rel (0) target = $region17
    $region16: #{tpu_custom_call.1} parent=1 // pred_region
      _
    $region17: #{tpu_custom_call.1} parent=1 // pred_fallthru
      _
    // Predicated region
    $region18: #{tpu_custom_call.1} parent=1 // pred_check
      _
    $region19: #{tpu_custom_call.1} parent=1 // pred_check_branch
      %52 = sbr.rel (0) target = $region21
    $region20: #{tpu_custom_call.1} parent=1 // pred_region
      %s54 = ssub.s32 512, 512
      %55 = vsyncadd [#allocation6], %s54
      %s56 = sshll.u32 [#allocation7], 4
      %s57 = int_to_ptr.vmem [resolvable:$true] %s56
      %62 = dma.hbm_to_vmem [thread:$0]  %s4, 512, %s57, [#allocation6], 128, 128, 8
    $region21: #{tpu_custom_call.1} parent=1 // pred_fallthru
      _
    // Predicated region
    $region22: #{tpu_custom_call.1} parent=1 // pred_check
      _
    $region23: #{tpu_custom_call.1} parent=1 // pred_check_branch
      %64 = sbr.rel (0) target = $region25
    $region24: #{tpu_custom_call.1} parent=1 // pred_region
      _
    $region25: #{tpu_custom_call.1} parent=1 // pred_fallthru
      _
    // Predicated region
    $region26: #{tpu_custom_call.1} parent=1 // pred_check
      _
    $region27: #{tpu_custom_call.1} parent=1 // pred_check_branch
      %66 = sbr.rel (0) target = $region29
    $region28: #{tpu_custom_call.1} parent=1 // pred_region
      _
    $region29: #{tpu_custom_call.1} parent=1 // pred_fallthru
      _
    // Predicated region
    $region30: #{tpu_custom_call.1} parent=1 // pred_check
      _
    $region31: #{tpu_custom_call.1} parent=1 // pred_check_branch
      %68 = sbr.rel (0) target = $region33
    $region32: #{tpu_custom_call.1} parent=1 // pred_region
      _
    $region33: #{tpu_custom_call.1} parent=1 // pred_fallthru
      _
    // Predicated region
    $region34: #{tpu_custom_call.1} parent=1 // pred_check
      _
    $region35: #{tpu_custom_call.1} parent=1 // pred_check_branch
      %70 = sbr.rel (0) target = $region37
    $region36: #{tpu_custom_call.1} parent=1 // pred_region
      %s72 = ssub.s32 1024, 1024
      %73 = vsyncadd [#allocation9], %s72
      %s74 = sshll.u32 [#allocation8], 4
      %s75 = int_to_ptr.vmem [resolvable:$true] %s74
      %80 = dma.hbm_to_vmem [thread:$0]  %s8, 1024, %s75, [#allocation9], 128, 128, 8
    $region37: #{tpu_custom_call.1} parent=1 // pred_fallthru
      _
    // Predicated region
    $region38: #{tpu_custom_call.1} parent=1 // pred_check
      _
    $region39: #{tpu_custom_call.1} parent=1 // pred_check_branch
      %82 = sbr.rel (0) target = $region41
    $region40: #{tpu_custom_call.1} parent=1 // pred_region
      _
    $region41: #{tpu_custom_call.1} parent=1 // pred_fallthru
      _
    // Predicated region
    $region42: #{tpu_custom_call.1} parent=1 // pred_check
      _
    $region43: #{tpu_custom_call.1} parent=1 // pred_check_branch
      %84 = sbr.rel (0) target = $region45
    $region44: #{tpu_custom_call.1} parent=1 // pred_region
      %s86 = ssub.s32 1024, 1024
      %87 = vsyncadd [#allocation9], %s86
      %s88 = sshll.u32 [#allocation10], 4
      %s89 = int_to_ptr.vmem [resolvable:$true] %s88
      %94 = dma.hbm_to_vmem [thread:$0]  %s10, 1024, %s89, [#allocation9], 128, 128, 8
    $region45: #{tpu_custom_call.1} parent=1 // pred_fallthru
      _
    // Predicated region
    $region46: #{tpu_custom_call.1} parent=1 // pred_check
      _
    $region47: #{tpu_custom_call.1} parent=1 // pred_check_branch
      %96 = sbr.rel (0) target = $region49
    $region48: #{tpu_custom_call.1} parent=1 // pred_region
      _
    $region49: #{tpu_custom_call.1} parent=1 // pred_fallthru
      _
    // Predicated region
    $region50: #{tpu_custom_call.1} parent=1 // pred_check
      _
    $region51: #{tpu_custom_call.1} parent=1 // pred_check_branch
      %98 = sbr.rel (0) target = $region53
    $region52: #{tpu_custom_call.1} parent=1 // pred_region
      _
    $region53: #{tpu_custom_call.1} parent=1 // pred_fallthru
      _
    // Predicated region
    $region54: #{tpu_custom_call.1} parent=1 // pred_check
      _
    $region55: #{tpu_custom_call.1} parent=1 // pred_check_branch
      %100 = sbr.rel (0) target = $region57
    $region56: #{tpu_custom_call.1} parent=1 // pred_region
      _
    $region57: #{tpu_custom_call.1} parent=1 // pred_fallthru
      _
    // Predicated region
    $region58: #{tpu_custom_call.1} parent=1 // pred_check
      _
    $region59: #{tpu_custom_call.1} parent=1 // pred_check_branch
      %102 = sbr.rel (0) target = $region61
    $region60: #{tpu_custom_call.1} parent=1 // pred_region
      %103 = dma.done [#allocation3], 128
    $region61: #{tpu_custom_call.1} parent=1 // pred_fallthru
      _
    // Predicated region
    $region62: #{tpu_custom_call.1} parent=1 // pred_check
      _
    $region63: #{tpu_custom_call.1} parent=1 // pred_check_branch
      %105 = sbr.rel (0) target = $region65
    $region64: #{tpu_custom_call.1} parent=1 // pred_region
      %106 = dma.done [#allocation6], 128
    $region65: #{tpu_custom_call.1} parent=1 // pred_fallthru
      _
    // Predicated region
    $region66: #{tpu_custom_call.1} parent=1 // pred_check
      _
    $region67: #{tpu_custom_call.1} parent=1 // pred_check_branch
      %108 = sbr.rel (0) target = $region69
    $region68: #{tpu_custom_call.1} parent=1 // pred_region
      %109 = dma.done [#allocation6], 512
    $region69: #{tpu_custom_call.1} parent=1 // pred_fallthru
      _
    // Predicated region
    $region70: #{tpu_custom_call.1} parent=1 // pred_check
      _
    $region71: #{tpu_custom_call.1} parent=1 // pred_check_branch
      %111 = sbr.rel (0) target = $region73
    $region72: #{tpu_custom_call.1} parent=1 // pred_region
      %112 = dma.done [#allocation9], 1024
    $region73: #{tpu_custom_call.1} parent=1 // pred_fallthru
      _
    // Predicated region
    $region74: #{tpu_custom_call.1} parent=1 // pred_check
      _
    $region75: #{tpu_custom_call.1} parent=1 // pred_check_branch
      %114 = sbr.rel (0) target = $region77
    $region76: #{tpu_custom_call.1} parent=1 // pred_region
      %115 = dma.done [#allocation9], 1024
    $region77: #{tpu_custom_call.1} parent=1 // pred_fallthru
      _
    %v116 = vld [vmem:[#allocation2] sm:$0xff]
    %v117 = vld [vmem:[%s2] sm:$0xff]
    %v118 = vld [vmem:[%s2 + $0x8] sm:$0xff]
    %v119 = vld [vmem:[%s3] sm:$0x1]
    %v121 = vlaneseq
    %v122 = vshrl.u32 %v121, 7
    %v123 = vsub.s32 0, %v122
    %v124 = vrot.slane %v119, %v123
    %vm126 = vcmask 130048
    %v128 = vsel %vm126, %v116, 0
    %130 = vmatprep.subr.mxu0 0.0
    %131 = vmatpush1.msra.mxu0 0.0
    %132 = vmatprep.subr.mxu0 0.0
    %133 = vmatpush1.msra.mxu0 0.0
    %134 = vmatprep.subr.mxu0 0.0
    %135 = vmatpush1.msra.mxu0 0.0
    %136 = vmatprep.subr.mxu0 0.0
    %137 = vmatpush1.msra.mxu0 0.0
    %138 = vmatprep.subr.mxu0 0.0
    %139 = vmatpush1.msra.mxu0 0.0
    %140 = vmatprep.subr.mxu0 0.0
    %141 = vmatpush1.msra.mxu0 0.0
    %142 = vmatprep.subr.mxu0 0.0
    %143 = vmatpush1.msra.mxu0 0.0
    %144 = vmatprep.subr.mxu0 0.0
    %145 = vmatpush1.msra.mxu0 0.0
    %146 = vmatprep.subr.mxu0 0.0
    %147 = vmatpush1.msra.mxu0 0.0
    %148 = vmatprep.subr.mxu0 0.0
    %149 = vmatpush1.msra.mxu0 0.0
    %150 = vmatprep.subr.mxu0 0.0
    %151 = vmatpush1.msra.mxu0 0.0
    %152 = vmatprep.subr.mxu0 0.0
    %153 = vmatpush1.msra.mxu0 0.0
    %154 = vmatprep.subr.mxu0 0.0
    %155 = vmatpush1.msra.mxu0 0.0
    %156 = vmatprep.subr.mxu0 0.0
    %157 = vmatpush1.msra.mxu0 0.0
    %158 = vmatprep.subr.mxu0 0.0
    %159 = vmatpush1.msra.mxu0 %v118
    %160 = vmatprep.subr.mxu0 0.0
    %161 = vmatpush1.msra.mxu0 %v117
    %162 = vmatprep.subr.mxu0 0.0
    %163 = vmatpush2.msra.mxu0 0.0
    %164 = vmatprep.subr.mxu0 0.0
    %165 = vmatpush2.msra.mxu0 0.0
    %166 = vmatprep.subr.mxu0 0.0
    %167 = vmatpush2.msra.mxu0 0.0
    %168 = vmatprep.subr.mxu0 0.0
    %169 = vmatpush2.msra.mxu0 0.0
    %170 = vmatprep.subr.mxu0 0.0
    %171 = vmatpush2.msra.mxu0 0.0
    %172 = vmatprep.subr.mxu0 0.0
    %173 = vmatpush2.msra.mxu0 0.0
    %174 = vmatprep.subr.mxu0 0.0
    %175 = vmatpush2.msra.mxu0 0.0
    %176 = vmatprep.subr.mxu0 0.0
    %177 = vmatpush2.msra.mxu0 0.0
    %178 = vmatprep.subr.mxu0 0.0
    %179 = vmatpush2.msra.mxu0 0.0
    %180 = vmatprep.subr.mxu0 0.0
    %181 = vmatpush2.msra.mxu0 0.0
    %182 = vmatprep.subr.mxu0 0.0
    %183 = vmatpush2.msra.mxu0 0.0
    %184 = vmatprep.subr.mxu0 0.0
    %185 = vmatpush2.msra.mxu0 0.0
    %186 = vmatprep.subr.mxu0 0.0
    %187 = vmatpush2.msra.mxu0 0.0
    %188 = vmatprep.subr.mxu0 0.0
    %189 = vmatpush2.msra.mxu0 0.0
    %190 = vmatprep.subr.mxu0 0.0
    %191 = vmatpush2.msra.mxu0 0.0
    %192 = vmatprep.subr.mxu0 0.0
    %193 = vmatpush2.msra.mxu0 0.0
    %194 = vmatprep.mubr.f32.mxu0 0.0
    %195 = vmatmul.mubr.f32.gmra.mxu0 %v128
    %v196 = vpop.f32.mrf.mxu0
    %v197 = vadd.f32 %v124, %v196
    %v198 = vpop.f32.mrf.mxu0
    %199 = vdwg.mxu0
    %v200 = vld [vmem:[#allocation7] sm:$0xff]
    %v201 = vld [vmem:[#allocation7 + $0x8] sm:$0xff]
    %v202 = vld [vmem:[#allocation7 + $0x10] sm:$0xff]
    %v203 = vld [vmem:[#allocation7 + $0x18] sm:$0xff]
    %v204 = vld [vmem:[%s5] sm:$0x1]
    %v206 = vlaneseq
    %v207 = vshrl.u32 %v206, 7
    %v208 = vsub.s32 0, %v207
    %v209 = vrot.slane %v204, %v208
    %vm211 = vcmask 261120
    %v213 = vsel %vm211, %v197, 0
    %215 = vmatprep.subr.mxu0 0.0
    %216 = vmatpush1.msra.mxu0 0.0
    %217 = vmatprep.subr.mxu0 0.0
    %218 = vmatpush1.msra.mxu0 0.0
    %219 = vmatprep.subr.mxu0 0.0
    %220 = vmatpush1.msra.mxu0 0.0
    %221 = vmatprep.subr.mxu0 0.0
    %222 = vmatpush1.msra.mxu0 0.0
    %223 = vmatprep.subr.mxu0 0.0
    %224 = vmatpush1.msra.mxu0 0.0
    %225 = vmatprep.subr.mxu0 0.0
    %226 = vmatpush1.msra.mxu0 0.0
    %227 = vmatprep.subr.mxu0 0.0
    %228 = vmatpush1.msra.mxu0 0.0
    %229 = vmatprep.subr.mxu0 0.0
    %230 = vmatpush1.msra.mxu0 0.0
    %231 = vmatprep.subr.mxu0 0.0
    %232 = vmatpush1.msra.mxu0 0.0
    %233 = vmatprep.subr.mxu0 0.0
    %234 = vmatpush1.msra.mxu0 0.0
    %235 = vmatprep.subr.mxu0 0.0
    %236 = vmatpush1.msra.mxu0 0.0
    %237 = vmatprep.subr.mxu0 0.0
    %238 = vmatpush1.msra.mxu0 0.0
    %239 = vmatprep.subr.mxu0 0.0
    %240 = vmatpush1.msra.mxu0 %v203
    %241 = vmatprep.subr.mxu0 0.0
    %242 = vmatpush1.msra.mxu0 %v202
    %243 = vmatprep.subr.mxu0 0.0
    %244 = vmatpush1.msra.mxu0 %v201
    %245 = vmatprep.subr.mxu0 0.0
    %246 = vmatpush1.msra.mxu0 %v200
    %247 = vmatprep.subr.mxu0 0.0
    %248 = vmatpush2.msra.mxu0 0.0
    %249 = vmatprep.subr.mxu0 0.0
    %250 = vmatpush2.msra.mxu0 0.0
    %251 = vmatprep.subr.mxu0 0.0
    %252 = vmatpush2.msra.mxu0 0.0
    %253 = vmatprep.subr.mxu0 0.0
    %254 = vmatpush2.msra.mxu0 0.0
    %255 = vmatprep.subr.mxu0 0.0
    %256 = vmatpush2.msra.mxu0 0.0
    %257 = vmatprep.subr.mxu0 0.0
    %258 = vmatpush2.msra.mxu0 0.0
    %259 = vmatprep.subr.mxu0 0.0
    %260 = vmatpush2.msra.mxu0 0.0
    %261 = vmatprep.subr.mxu0 0.0
    %262 = vmatpush2.msra.mxu0 0.0
    %263 = vmatprep.subr.mxu0 0.0
    %264 = vmatpush2.msra.mxu0 0.0
    %265 = vmatprep.subr.mxu0 0.0
    %266 = vmatpush2.msra.mxu0 0.0
    %267 = vmatprep.subr.mxu0 0.0
    %268 = vmatpush2.msra.mxu0 0.0
    %269 = vmatprep.subr.mxu0 0.0
    %270 = vmatpush2.msra.mxu0 0.0
    %271 = vmatprep.subr.mxu0 0.0
    %272 = vmatpush2.msra.mxu0 0.0
    %273 = vmatprep.subr.mxu0 0.0
    %274 = vmatpush2.msra.mxu0 0.0
    %275 = vmatprep.subr.mxu0 0.0
    %276 = vmatpush2.msra.mxu0 0.0
    %277 = vmatprep.subr.mxu0 0.0
    %278 = vmatpush2.msra.mxu0 0.0
    %279 = vmatprep.mubr.f32.mxu0 0.0
    %280 = vmatmul.mubr.f32.gmra.mxu0 %v213
    %v281 = vpop.f32.mrf.mxu0
    %v282 = vadd.f32 %v209, %v281
    %v283 = vpop.f32.mrf.mxu0
    %284 = vdwg.mxu0
    %v285 = vmax.f32 %v282, 0.0
    %v286 = vld [vmem:[%s6] sm:$0xff]
    %v287 = vld [vmem:[%s6 + $0x8] sm:$0xff]
    %v288 = vld [vmem:[%s6 + $0x10] sm:$0xff]
    %v289 = vld [vmem:[%s6 + $0x18] sm:$0xff]
    %v290 = vld [vmem:[%s6 + $0x20] sm:$0xff]
    %v291 = vld [vmem:[%s6 + $0x28] sm:$0xff]
    %v292 = vld [vmem:[%s6 + $0x30] sm:$0xff]
    %v293 = vld [vmem:[%s6 + $0x38] sm:$0xff]
    %v294 = vld [vmem:[%s7] sm:$0x1]
    %v296 = vlaneseq
    %v297 = vshrl.u32 %v296, 7
    %v298 = vsub.s32 0, %v297
    %v299 = vrot.slane %v294, %v298
    %vm301 = vcmask 523264
    %v303 = vsel %vm301, %v285, 0
    %305 = vmatprep.subr.mxu0 0.0
    %306 = vmatpush1.msra.mxu0 0.0
    %307 = vmatprep.subr.mxu0 0.0
    %308 = vmatpush1.msra.mxu0 0.0
    %309 = vmatprep.subr.mxu0 0.0
    %310 = vmatpush1.msra.mxu0 0.0
    %311 = vmatprep.subr.mxu0 0.0
    %312 = vmatpush1.msra.mxu0 0.0
    %313 = vmatprep.subr.mxu0 0.0
    %314 = vmatpush1.msra.mxu0 0.0
    %315 = vmatprep.subr.mxu0 0.0
    %316 = vmatpush1.msra.mxu0 0.0
    %317 = vmatprep.subr.mxu0 0.0
    %318 = vmatpush1.msra.mxu0 0.0
    %319 = vmatprep.subr.mxu0 0.0
    %320 = vmatpush1.msra.mxu0 0.0
    %321 = vmatprep.subr.mxu0 0.0
    %322 = vmatpush1.msra.mxu0 %v293
    %323 = vmatprep.subr.mxu0 0.0
    %324 = vmatpush1.msra.mxu0 %v292
    %325 = vmatprep.subr.mxu0 0.0
    %326 = vmatpush1.msra.mxu0 %v291
    %327 = vmatprep.subr.mxu0 0.0
    %328 = vmatpush1.msra.mxu0 %v290
    %329 = vmatprep.subr.mxu0 0.0
    %330 = vmatpush1.msra.mxu0 %v289
    %331 = vmatprep.subr.mxu0 0.0
    %332 = vmatpush1.msra.mxu0 %v288
    %333 = vmatprep.subr.mxu0 0.0
    %334 = vmatpush1.msra.mxu0 %v287
    %335 = vmatprep.subr.mxu0 0.0
    %336 = vmatpush1.msra.mxu0 %v286
    %337 = vmatprep.subr.mxu0 0.0
    %338 = vmatpush2.msra.mxu0 0.0
    %339 = vmatprep.subr.mxu0 0.0
    %340 = vmatpush2.msra.mxu0 0.0
    %341 = vmatprep.subr.mxu0 0.0
    %342 = vmatpush2.msra.mxu0 0.0
    %343 = vmatprep.subr.mxu0 0.0
    %344 = vmatpush2.msra.mxu0 0.0
    %345 = vmatprep.subr.mxu0 0.0
    %346 = vmatpush2.msra.mxu0 0.0
    %347 = vmatprep.subr.mxu0 0.0
    %348 = vmatpush2.msra.mxu0 0.0
    %349 = vmatprep.subr.mxu0 0.0
    %350 = vmatpush2.msra.mxu0 0.0
    %351 = vmatprep.subr.mxu0 0.0
    %352 = vmatpush2.msra.mxu0 0.0
    %353 = vmatprep.subr.mxu0 0.0
    %354 = vmatpush2.msra.mxu0 0.0
    %355 = vmatprep.subr.mxu0 0.0
    %356 = vmatpush2.msra.mxu0 0.0
    %357 = vmatprep.subr.mxu0 0.0
    %358 = vmatpush2.msra.mxu0 0.0
    %359 = vmatprep.subr.mxu0 0.0
    %360 = vmatpush2.msra.mxu0 0.0
    %361 = vmatprep.subr.mxu0 0.0
    %362 = vmatpush2.msra.mxu0 0.0
    %363 = vmatprep.subr.mxu0 0.0
    %364 = vmatpush2.msra.mxu0 0.0
    %365 = vmatprep.subr.mxu0 0.0
    %366 = vmatpush2.msra.mxu0 0.0
    %367 = vmatprep.subr.mxu0 0.0
    %368 = vmatpush2.msra.mxu0 0.0
    %369 = vmatprep.mubr.f32.mxu0 0.0
    %370 = vmatmul.mubr.f32.gmra.mxu0 %v303
    %v371 = vpop.f32.mrf.mxu0
    %v372 = vadd.f32 %v299, %v371
    %v373 = vpop.f32.mrf.mxu0
    %374 = vdwg.mxu0
    %v375 = vmax.f32 %v372, 0.0
    %v376 = vld [vmem:[#allocation8] sm:$0xff]
    %v377 = vld [vmem:[#allocation8 + $0x8] sm:$0xff]
    %v378 = vld [vmem:[#allocation8 + $0x10] sm:$0xff]
    %v379 = vld [vmem:[#allocation8 + $0x18] sm:$0xff]
    %v380 = vld [vmem:[#allocation8 + $0x20] sm:$0xff]
    %v381 = vld [vmem:[#allocation8 + $0x28] sm:$0xff]
    %v382 = vld [vmem:[#allocation8 + $0x30] sm:$0xff]
    %v383 = vld [vmem:[#allocation8 + $0x38] sm:$0xff]
    %v384 = vld [vmem:[%s9] sm:$0x1]
    %v386 = vlaneseq
    %v387 = vshrl.u32 %v386, 7
    %v388 = vsub.s32 0, %v387
    %v389 = vrot.slane %v384, %v388
    %v392 = vsel %vm301, %v375, 0
    %394 = vmatprep.subr.mxu0 0.0
    %395 = vmatpush1.msra.mxu0 0.0
    %396 = vmatprep.subr.mxu0 0.0
    %397 = vmatpush1.msra.mxu0 0.0
    %398 = vmatprep.subr.mxu0 0.0
    %399 = vmatpush1.msra.mxu0 0.0
    %400 = vmatprep.subr.mxu0 0.0
    %401 = vmatpush1.msra.mxu0 0.0
    %402 = vmatprep.subr.mxu0 0.0
    %403 = vmatpush1.msra.mxu0 0.0
    %404 = vmatprep.subr.mxu0 0.0
    %405 = vmatpush1.msra.mxu0 0.0
    %406 = vmatprep.subr.mxu0 0.0
    %407 = vmatpush1.msra.mxu0 0.0
    %408 = vmatprep.subr.mxu0 0.0
    %409 = vmatpush1.msra.mxu0 0.0
    %410 = vmatprep.subr.mxu0 0.0
    %411 = vmatpush1.msra.mxu0 %v383
    %412 = vmatprep.subr.mxu0 0.0
    %413 = vmatpush1.msra.mxu0 %v382
    %414 = vmatprep.subr.mxu0 0.0
    %415 = vmatpush1.msra.mxu0 %v381
    %416 = vmatprep.subr.mxu0 0.0
    %417 = vmatpush1.msra.mxu0 %v380
    %418 = vmatprep.subr.mxu0 0.0
    %419 = vmatpush1.msra.mxu0 %v379
    %420 = vmatprep.subr.mxu0 0.0
    %421 = vmatpush1.msra.mxu0 %v378
    %422 = vmatprep.subr.mxu0 0.0
    %423 = vmatpush1.msra.mxu0 %v377
    %424 = vmatprep.subr.mxu0 0.0
    %425 = vmatpush1.msra.mxu0 %v376
    %426 = vmatprep.subr.mxu0 0.0
    %427 = vmatpush2.msra.mxu0 0.0
    %428 = vmatprep.subr.mxu0 0.0
    %429 = vmatpush2.msra.mxu0 0.0
    %430 = vmatprep.subr.mxu0 0.0
    %431 = vmatpush2.msra.mxu0 0.0
    %432 = vmatprep.subr.mxu0 0.0
    %433 = vmatpush2.msra.mxu0 0.0
    %434 = vmatprep.subr.mxu0 0.0
    %435 = vmatpush2.msra.mxu0 0.0
    %436 = vmatprep.subr.mxu0 0.0
    %437 = vmatpush2.msra.mxu0 0.0
    %438 = vmatprep.subr.mxu0 0.0
    %439 = vmatpush2.msra.mxu0 0.0
    %440 = vmatprep.subr.mxu0 0.0
    %441 = vmatpush2.msra.mxu0 0.0
    %442 = vmatprep.subr.mxu0 0.0
    %443 = vmatpush2.msra.mxu0 0.0
    %444 = vmatprep.subr.mxu0 0.0
    %445 = vmatpush2.msra.mxu0 0.0
    %446 = vmatprep.subr.mxu0 0.0
    %447 = vmatpush2.msra.mxu0 0.0
    %448 = vmatprep.subr.mxu0 0.0
    %449 = vmatpush2.msra.mxu0 0.0
    %450 = vmatprep.subr.mxu0 0.0
    %451 = vmatpush2.msra.mxu0 0.0
    %452 = vmatprep.subr.mxu0 0.0
    %453 = vmatpush2.msra.mxu0 0.0
    %454 = vmatprep.subr.mxu0 0.0
    %455 = vmatpush2.msra.mxu0 0.0
    %456 = vmatprep.subr.mxu0 0.0
    %457 = vmatpush2.msra.mxu0 0.0
    %458 = vmatprep.mubr.f32.mxu0 0.0
    %459 = vmatmul.mubr.f32.gmra.mxu0 %v392
    %v460 = vpop.f32.mrf.mxu0
    %v461 = vadd.f32 %v389, %v460
    %v462 = vpop.f32.mrf.mxu0
    %463 = vdwg.mxu0
    %v464 = vmax.f32 %v461, 0.0
    %v465 = vld [vmem:[#allocation10] sm:$0xff]
    %v466 = vld [vmem:[#allocation10 + $0x8] sm:$0xff]
    %v467 = vld [vmem:[#allocation10 + $0x10] sm:$0xff]
    %v468 = vld [vmem:[#allocation10 + $0x18] sm:$0xff]
    %v469 = vld [vmem:[#allocation10 + $0x20] sm:$0xff]
    %v470 = vld [vmem:[#allocation10 + $0x28] sm:$0xff]
    %v471 = vld [vmem:[#allocation10 + $0x30] sm:$0xff]
    %v472 = vld [vmem:[#allocation10 + $0x38] sm:$0xff]
    %v473 = vld [vmem:[%s11] sm:$0x1]
    %v475 = vlaneseq
    %v476 = vshrl.u32 %v475, 7
    %v477 = vsub.s32 0, %v476
    %v478 = vrot.slane %v473, %v477
    %v481 = vsel %vm301, %v464, 0
    %483 = vmatprep.subr.mxu0 0.0
    %484 = vmatpush1.msra.mxu0 0.0
    %485 = vmatprep.subr.mxu0 0.0
    %486 = vmatpush1.msra.mxu0 0.0
    %487 = vmatprep.subr.mxu0 0.0
    %488 = vmatpush1.msra.mxu0 0.0
    %489 = vmatprep.subr.mxu0 0.0
    %490 = vmatpush1.msra.mxu0 0.0
    %491 = vmatprep.subr.mxu0 0.0
    %492 = vmatpush1.msra.mxu0 0.0
    %493 = vmatprep.subr.mxu0 0.0
    %494 = vmatpush1.msra.mxu0 0.0
    %495 = vmatprep.subr.mxu0 0.0
    %496 = vmatpush1.msra.mxu0 0.0
    %497 = vmatprep.subr.mxu0 0.0
    %498 = vmatpush1.msra.mxu0 0.0
    %499 = vmatprep.subr.mxu0 0.0
    %500 = vmatpush1.msra.mxu0 %v472
    %501 = vmatprep.subr.mxu0 0.0
    %502 = vmatpush1.msra.mxu0 %v471
    %503 = vmatprep.subr.mxu0 0.0
    %504 = vmatpush1.msra.mxu0 %v470
    %505 = vmatprep.subr.mxu0 0.0
    %506 = vmatpush1.msra.mxu0 %v469
    %507 = vmatprep.subr.mxu0 0.0
    %508 = vmatpush1.msra.mxu0 %v468
    %509 = vmatprep.subr.mxu0 0.0
    %510 = vmatpush1.msra.mxu0 %v467
    %511 = vmatprep.subr.mxu0 0.0
    %512 = vmatpush1.msra.mxu0 %v466
    %513 = vmatprep.subr.mxu0 0.0
    %514 = vmatpush1.msra.mxu0 %v465
    %515 = vmatprep.subr.mxu0 0.0
    %516 = vmatpush2.msra.mxu0 0.0
    %517 = vmatprep.subr.mxu0 0.0
    %518 = vmatpush2.msra.mxu0 0.0
    %519 = vmatprep.subr.mxu0 0.0
    %520 = vmatpush2.msra.mxu0 0.0
    %521 = vmatprep.subr.mxu0 0.0
    %522 = vmatpush2.msra.mxu0 0.0
    %523 = vmatprep.subr.mxu0 0.0
    %524 = vmatpush2.msra.mxu0 0.0
    %525 = vmatprep.subr.mxu0 0.0
    %526 = vmatpush2.msra.mxu0 0.0
    %527 = vmatprep.subr.mxu0 0.0
    %528 = vmatpush2.msra.mxu0 0.0
    %529 = vmatprep.subr.mxu0 0.0
    %530 = vmatpush2.msra.mxu0 0.0
    %531 = vmatprep.subr.mxu0 0.0
    %532 = vmatpush2.msra.mxu0 0.0
    %533 = vmatprep.subr.mxu0 0.0
    %534 = vmatpush2.msra.mxu0 0.0
    %535 = vmatprep.subr.mxu0 0.0
    %536 = vmatpush2.msra.mxu0 0.0
    %537 = vmatprep.subr.mxu0 0.0
    %538 = vmatpush2.msra.mxu0 0.0
    %539 = vmatprep.subr.mxu0 0.0
    %540 = vmatpush2.msra.mxu0 0.0
    %541 = vmatprep.subr.mxu0 0.0
    %542 = vmatpush2.msra.mxu0 0.0
    %543 = vmatprep.subr.mxu0 0.0
    %544 = vmatpush2.msra.mxu0 0.0
    %545 = vmatprep.subr.mxu0 0.0
    %546 = vmatpush2.msra.mxu0 0.0
    %547 = vmatprep.mubr.f32.mxu0 0.0
    %548 = vmatmul.mubr.f32.gmra.mxu0 %v481
    %v549 = vpop.f32.mrf.mxu0
    %v550 = vadd.f32 %v478, %v549
    %v551 = vpop.f32.mrf.mxu0
    %552 = vdwg.mxu0
    %v553 = vmax.f32 %v550, 0.0
    %v554 = vld [vmem:[%s12] sm:$0xff]
    %v555 = vld [vmem:[%s12 + $0x8] sm:$0xff]
    %v556 = vld [vmem:[%s12 + $0x10] sm:$0xff]
    %v557 = vld [vmem:[%s12 + $0x18] sm:$0xff]
    %v558 = vld [vmem:[%s12 + $0x20] sm:$0xff]
    %v559 = vld [vmem:[%s12 + $0x28] sm:$0xff]
    %v560 = vld [vmem:[%s12 + $0x30] sm:$0xff]
    %v561 = vld [vmem:[%s12 + $0x38] sm:$0xff]
    %v562 = vld [vmem:[%s13] sm:$0x1]
    %v564 = vlaneseq
    %v565 = vshrl.u32 %v564, 7
    %v566 = vsub.s32 0, %v565
    %v567 = vrot.slane %v562, %v566
    %v570 = vsel %vm301, %v553, 0
    %572 = vmatprep.subr.mxu0 0.0
    %573 = vmatpush1.msra.mxu0 0.0
    %574 = vmatprep.subr.mxu0 0.0
    %575 = vmatpush1.msra.mxu0 0.0
    %576 = vmatprep.subr.mxu0 0.0
    %577 = vmatpush1.msra.mxu0 0.0
    %578 = vmatprep.subr.mxu0 0.0
    %579 = vmatpush1.msra.mxu0 0.0
    %580 = vmatprep.subr.mxu0 0.0
    %581 = vmatpush1.msra.mxu0 0.0
    %582 = vmatprep.subr.mxu0 0.0
    %583 = vmatpush1.msra.mxu0 0.0
    %584 = vmatprep.subr.mxu0 0.0
    %585 = vmatpush1.msra.mxu0 0.0
    %586 = vmatprep.subr.mxu0 0.0
    %587 = vmatpush1.msra.mxu0 0.0
    %588 = vmatprep.subr.mxu0 0.0
    %589 = vmatpush1.msra.mxu0 %v561
    %590 = vmatprep.subr.mxu0 0.0
    %591 = vmatpush1.msra.mxu0 %v560
    %592 = vmatprep.subr.mxu0 0.0
    %593 = vmatpush1.msra.mxu0 %v559
    %594 = vmatprep.subr.mxu0 0.0
    %595 = vmatpush1.msra.mxu0 %v558
    %596 = vmatprep.subr.mxu0 0.0
    %597 = vmatpush1.msra.mxu0 %v557
    %598 = vmatprep.subr.mxu0 0.0
    %599 = vmatpush1.msra.mxu0 %v556
    %600 = vmatprep.subr.mxu0 0.0
    %601 = vmatpush1.msra.mxu0 %v555
    %602 = vmatprep.subr.mxu0 0.0
    %603 = vmatpush1.msra.mxu0 %v554
    %604 = vmatprep.subr.mxu0 0.0
    %605 = vmatpush2.msra.mxu0 0.0
    %606 = vmatprep.subr.mxu0 0.0
    %607 = vmatpush2.msra.mxu0 0.0
    %608 = vmatprep.subr.mxu0 0.0
    %609 = vmatpush2.msra.mxu0 0.0
    %610 = vmatprep.subr.mxu0 0.0
    %611 = vmatpush2.msra.mxu0 0.0
    %612 = vmatprep.subr.mxu0 0.0
    %613 = vmatpush2.msra.mxu0 0.0
    %614 = vmatprep.subr.mxu0 0.0
    %615 = vmatpush2.msra.mxu0 0.0
    %616 = vmatprep.subr.mxu0 0.0
    %617 = vmatpush2.msra.mxu0 0.0
    %618 = vmatprep.subr.mxu0 0.0
    %619 = vmatpush2.msra.mxu0 0.0
    %620 = vmatprep.subr.mxu0 0.0
    %621 = vmatpush2.msra.mxu0 0.0
    %622 = vmatprep.subr.mxu0 0.0
    %623 = vmatpush2.msra.mxu0 0.0
    %624 = vmatprep.subr.mxu0 0.0
    %625 = vmatpush2.msra.mxu0 0.0
    %626 = vmatprep.subr.mxu0 0.0
    %627 = vmatpush2.msra.mxu0 0.0
    %628 = vmatprep.subr.mxu0 0.0
    %629 = vmatpush2.msra.mxu0 0.0
    %630 = vmatprep.subr.mxu0 0.0
    %631 = vmatpush2.msra.mxu0 0.0
    %632 = vmatprep.subr.mxu0 0.0
    %633 = vmatpush2.msra.mxu0 0.0
    %634 = vmatprep.subr.mxu0 0.0
    %635 = vmatpush2.msra.mxu0 0.0
    %636 = vmatprep.mubr.f32.mxu0 0.0
    %637 = vmatmul.mubr.f32.gmra.mxu0 %v570
    %v638 = vpop.f32.mrf.mxu0
    %v639 = vadd.f32 %v567, %v638
    %v640 = vpop.f32.mrf.mxu0
    %641 = vdwg.mxu0
    %v642 = vmax.f32 %v639, -20.0
    %v643 = vmin.f32 %v642, 2.0
    %v644 = vmul.f32 %v643, 1.442695
    %v645 = vpow.pop %v644
    %vm646 = vcmask 64512
    %647 = vst.msk [vmem:[#allocation12] sm:$0xff] %vm646, %v639
    %649 = vrot.lane.b32.xlu0 %v645, 120
    %v650 = vpop.permute.xlu0 %649
    %652 = vst.msk [vmem:[#allocation14] sm:$0xff] %vm646, %v650
    %v653 = vld [vmem:[#allocation5] sm:$0xff]
    %655 = vrot.lane.b32.xlu0 %v653, 8
    %v656 = vpop.permute.xlu0 %655
    %v658 = vmul.f32 %v645, %v656
    %660 = vrot.lane.b32.xlu0 %v658, 120
    %v661 = vpop.permute.xlu0 %660
    %v663 = vadd.f32 %v639, %v661
    %664 = vst.msk [vmem:[#allocation11] sm:$0xff] %vm646, %v663
    // Predicated region
    $region78: #{tpu_custom_call.1} parent=1 // pred_check
      _
    $region79: #{tpu_custom_call.1} parent=1 // pred_check_branch
      %666 = sbr.rel (0) target = $region81
    $region80: #{tpu_custom_call.1} parent=1 // pred_region
      %s668 = ssub.s32 128, 128
      %669 = vsyncadd [#allocation4], %s668
      %s671 = sshll.u32 [#allocation11], 4
      %s672 = int_to_ptr.vmem [resolvable:$true] %s671
      %674 = dma.vmem_to_hbm [thread:$0]  %s672, 128, %s14, [#allocation4]
    $region81: #{tpu_custom_call.1} parent=1 // pred_fallthru
      _
    // Predicated region
    $region82: #{tpu_custom_call.1} parent=1 // pred_check
      _
    $region83: #{tpu_custom_call.1} parent=1 // pred_check_branch
      %676 = sbr.rel (0) target = $region85
    $region84: #{tpu_custom_call.1} parent=1 // pred_region
      %s678 = ssub.s32 128, 128
      %679 = vsyncadd [#allocation13], %s678
      %s681 = sshll.u32 [#allocation12], 4
      %s682 = int_to_ptr.vmem [resolvable:$true] %s681
      %684 = dma.vmem_to_hbm [thread:$0]  %s682, 128, %s15, [#allocation13]
    $region85: #{tpu_custom_call.1} parent=1 // pred_fallthru
      _
    // Predicated region
    $region86: #{tpu_custom_call.1} parent=1 // pred_check
      _
    $region87: #{tpu_custom_call.1} parent=1 // pred_check_branch
      %686 = sbr.rel (0) target = $region89
    $region88: #{tpu_custom_call.1} parent=1 // pred_region
      %s688 = ssub.s32 128, 128
      %689 = vsyncadd [#allocation13], %s688
      %s691 = sshll.u32 [#allocation14], 4
      %s692 = int_to_ptr.vmem [resolvable:$true] %s691
      %694 = dma.vmem_to_hbm [thread:$0]  %s692, 128, %s16, [#allocation13]
    $region89: #{tpu_custom_call.1} parent=1 // pred_fallthru
      _
    // Predicated region
    $region90: #{tpu_custom_call.1} parent=1 // pred_check
      _
    $region91: #{tpu_custom_call.1} parent=1 // pred_check_branch
      %696 = sbr.rel (0) target = $region93
    $region92: #{tpu_custom_call.1} parent=1 // pred_region
      %697 = dma.done [#allocation4], 128
    $region93: #{tpu_custom_call.1} parent=1 // pred_fallthru
      _
    // Predicated region
    $region94: #{tpu_custom_call.1} parent=1 // pred_check
      _
    $region95: #{tpu_custom_call.1} parent=1 // pred_check_branch
      %699 = sbr.rel (0) target = $region97
    $region96: #{tpu_custom_call.1} parent=1 // pred_region
      %700 = dma.done [#allocation13], 128
    $region97: #{tpu_custom_call.1} parent=1 // pred_fallthru
      _
    // Predicated region
    $region98: #{tpu_custom_call.1} parent=1 // pred_check
      _
    $region99: #{tpu_custom_call.1} parent=1 // pred_check_branch
      %702 = sbr.rel (0) target = $region101
    $region100: #{tpu_custom_call.1} parent=1 // pred_region
      %703 = dma.done [#allocation13], 128
    $region101: #{tpu_custom_call.1} parent=1 // pred_fallthru
      _
    %704 = vsyncpa [#allocation3], 1
    %705 = vsyncpa [#allocation6], 1
    %706 = vsyncpa [#allocation9], 1
    %707 = vsyncpa [#allocation4], 1
    %708 = vsyncpa [#allocation13], 1

</llo_original>
